<compile_context>
chip_gen: v6e
topology: v6e:2x2x1
jax: 0.10.0
libtpu: 0.0.40
codegen_flags: <defaults>
</compile_context>

<pallas_src>
from functools import partial

import jax
import jax.numpy as jnp
from jax.experimental import pallas as pl
from jax.experimental.pallas import tpu as pltpu

_SINGLE_TILE_MAX = 256   # up to this many rows: one full-dim tile, no padding
_TM_MAX = 512            # max rows per grid step for large batches


def _round_up(x, m):
    return pl.cdiv(x, m) * m


def _mlp_kernel(x_ref, w1_ref, b1_ref, w3_ref, b3_ref, w4_ref, b4_ref,
                w2_ref, b2_ref, o_ref):
    """o = relu(relu(relu(x@w1+b1)@w3+b3)@w4+b4)@w2 + b2.

    All weights/biases are VMEM-resident across grid steps (constant index
    maps); only the activation tile moves.  MXU runs on bf16 operands with f32
    accumulation; the bias-add / ReLU epilogue stays in f32 on the VPU.
    """
    x = x_ref[...].astype(jnp.bfloat16)
    h = jnp.dot(x, w1_ref[...], preferred_element_type=jnp.float32)
    h = jnp.maximum(h + b1_ref[...], 0.0)
    h = jnp.dot(h.astype(jnp.bfloat16), w3_ref[...],
                preferred_element_type=jnp.float32)
    h = jnp.maximum(h + b3_ref[...], 0.0)
    h = jnp.dot(h.astype(jnp.bfloat16), w4_ref[...],
                preferred_element_type=jnp.float32)
    h = jnp.maximum(h + b4_ref[...], 0.0)
    o_ref[...] = (jnp.dot(h.astype(jnp.bfloat16), w2_ref[...],
                          preferred_element_type=jnp.float32) + b2_ref[...])


def pack_mnist_params(w1, b1, w3, b3, w4, b4, w2, b2):
    """One-time packing of PyTorch-layout (out, in) weights.

    Returns weights transposed to (in, out), column-padded to multiples of 128,
    cast to bf16; biases zero-padded to the same width, kept f32 (1, width).
    The padded rows/cols are zero, hence mathematically inert.
    """
    D = w1.shape[1]
    H = w1.shape[0]
    O = w2.shape[0]
    Hp = _round_up(H, 128)
    Op = _round_up(O, 128)

    def wpack(w, rows, cols):
        wt = jnp.transpose(w).astype(jnp.float32)              # (in, out)
        wt = jnp.pad(wt, ((0, rows - wt.shape[0]), (0, cols - wt.shape[1])))
        return wt.astype(jnp.bfloat16)

    def bpack(b, cols):
        return jnp.pad(b.astype(jnp.float32), (0, cols - b.shape[0])).reshape(1, cols)

    # w1 keeps exactly D rows (x is NOT padded along the feature axis).
    return (wpack(w1, D, Hp), bpack(b1, Hp),
            wpack(w3, Hp, Hp), bpack(b3, Hp),
            wpack(w4, Hp, Hp), bpack(b4, Hp),
            wpack(w2, Hp, Op), bpack(b2, Op))


@partial(jax.jit, static_argnames=("out_size",))
def mnist_net_forward(x, packed, *, out_size):
    """Forward pass of MnistNet using pre-packed parameters."""
    w1p, b1p, w3p, b3p, w4p, b4p, w2p, b2p = packed

    N = x.shape[0]
    xf = x.reshape(N, -1)                       # xb.view(xb.size(0), -1)
    if xf.dtype != jnp.bfloat16:
        xf = xf.astype(jnp.float32)
    D = xf.shape[1]
    Hp = w1p.shape[1]
    Op = w2p.shape[1]

    # ---- batch tiling -------------------------------------------------------
    if N <= _SINGLE_TILE_MAX:
        # One full-dim tile: no batch padding, single launch.
        Mp, tm = N, N
        xp = xf
    else:
        # >= 2 grid steps (keeps both v7x TensorCores busy), tile <= 512 rows.
        Mp0 = _round_up(N, 8)
        tm = min(_TM_MAX, _round_up(pl.cdiv(Mp0, 2), 8))
        Mp = _round_up(Mp0, tm)
        xp = xf if Mp == N else jnp.pad(xf, ((0, Mp - N), (0, 0)))
    steps = Mp // tm

    # ---- cost hint for the XLA scheduler ------------------------------------
    w_elems = D * Hp + 2 * Hp * Hp + Hp * Op
    flops = 2 * Mp * w_elems
    bytes_accessed = (Mp * D * xp.dtype.itemsize      # activation stream in
                      + w_elems * 2                   # bf16 weights
                      + (3 * Hp + Op) * 4             # f32 biases
                      + Mp * Op * 4)                  # f32 output
    cost = pl.CostEstimate(flops=flops, transcendentals=0,
                           bytes_accessed=bytes_accessed)

    out = pl.pallas_call(
        _mlp_kernel,
        out_shape=jax.ShapeDtypeStruct((Mp, Op), jnp.float32),
        grid=(steps,),
        in_specs=[
            # Activation tile: full (unpadded) feature axis; only block that moves.
            pl.BlockSpec((tm, D), lambda i: (i, 0)),
            # Weights / biases: constant index maps -> VMEM-resident across steps.
            pl.BlockSpec((D, Hp), lambda i: (0, 0)),
            pl.BlockSpec((1, Hp), lambda i: (0, 0)),
            pl.BlockSpec((Hp, Hp), lambda i: (0, 0)),
            pl.BlockSpec((1, Hp), lambda i: (0, 0)),
            pl.BlockSpec((Hp, Hp), lambda i: (0, 0)),
            pl.BlockSpec((1, Hp), lambda i: (0, 0)),
            pl.BlockSpec((Hp, Op), lambda i: (0, 0)),
            pl.BlockSpec((1, Op), lambda i: (0, 0)),
        ],
        out_specs=pl.BlockSpec((tm, Op), lambda i: (i, 0)),   # lane-dense store
        compiler_params=pltpu.CompilerParams(
            dimension_semantics=("parallel",),
            vmem_limit_bytes=32 * 1024 * 1024),
        cost_estimate=cost,
    )(xp, w1p, b1p, w3p, b3p, w4p, b4p, w2p, b2p)

    return out[:N, :out_size]


def _reference_forward(x, w1, b1, w3, b3, w4, b4, w2, b2):
    """Pure-JAX f32 reference mirroring the PyTorch forward."""
    hp = jax.lax.Precision.HIGHEST
    xf = x.reshape(x.shape[0], -1).astype(jnp.float32)
    h = jnp.maximum(jnp.dot(xf, w1.T, precision=hp) + b1, 0.0)
    h = jnp.maximum(jnp.dot(h, w3.T, precision=hp) + b3, 0.0)
    h = jnp.maximum(jnp.dot(h, w4.T, precision=hp) + b4, 0.0)
    return jnp.dot(h, w2.T, precision=hp) + b2


if __name__ == "__main__":
    key = jax.random.PRNGKey(0)
    ks = jax.random.split(key, 10)

    # Small MNIST-like configuration.
    in_size, hidden, out_size = 28 * 28, 128, 10

    def linear_init(kw, kb, out_f, in_f):
        bound = 1.0 / jnp.sqrt(jnp.float32(in_f))
        w = jax.random.uniform(kw, (out_f, in_f), jnp.float32, -bound, bound)
        b = jax.random.uniform(kb, (out_f,), jnp.float32, -bound, bound)
        return w, b

    w1, b1 = linear_init(ks[0], ks[1], hidden, in_size)     # nn.Linear(in, hidden)
    w3, b3 = linear_init(ks[2], ks[3], hidden, hidden)      # nn.Linear(hidden, hidden)
    w4, b4 = linear_init(ks[4], ks[5], hidden, hidden)      # nn.Linear(hidden, hidden)
    w2, b2 = linear_init(ks[6], ks[7], out_size, hidden)    # nn.Linear(hidden, out)

    # Pack once (this is the expensive transpose/pad/cast the per-call path avoids).
    packed = jax.block_until_ready(
        pack_mnist_params(w1, b1, w3, b3, w4, b4, w2, b2))

    # bf16 MXU operands vs. f32-HIGHEST reference: rounding of the K=784 dot
    # dominates; errors stay well under ~1e-2, so 3e-2 tolerance is comfortable.
    TOL = 3e-2

    # Case 1: small-batch latency path (single full-dim tile, no padding at all).
    x_small = jax.random.normal(ks[8], (2, 1, 28, 28), jnp.float32)
    out = jax.block_until_ready(
        mnist_net_forward(x_small, packed, out_size=out_size))
    assert out.shape == (2, out_size), out.shape
    ref = _reference_forward(x_small, w1, b1, w3, b3, w4, b4, w2, b2)
    err = float(jnp.max(jnp.abs(out - ref)))
    assert jnp.allclose(out, ref, rtol=TOL, atol=TOL), err

    # Case 2: larger batch exercising the multi-step ("parallel") grid path.
    x_big = jax.random.normal(ks[9], (300, 1, 28, 28), jnp.float32)
    out_big = jax.block_until_ready(
        mnist_net_forward(x_big, packed, out_size=out_size))
    assert out_big.shape == (300, out_size), out_big.shape
    ref_big = _reference_forward(x_big, w1, b1, w3, b3, w4, b4, w2, b2)
    err_big = float(jnp.max(jnp.abs(out_big - ref_big)))
    assert jnp.allclose(out_big, ref_big, rtol=TOL, atol=TOL), err_big

    print("KERNEL_OK")
</pallas_src>

<mosaic_0001>
module attributes {stable_mosaic.version = 11 : i64} {
  func.func @_mlp_kernel(%arg0: i32, %arg1: memref<2x784xf32, #tpu.memory_space<vmem>>, %arg2: memref<784x128xbf16, #tpu.memory_space<vmem>>, %arg3: memref<1x128xf32, #tpu.memory_space<vmem>>, %arg4: memref<128x128xbf16, #tpu.memory_space<vmem>>, %arg5: memref<1x128xf32, #tpu.memory_space<vmem>>, %arg6: memref<128x128xbf16, #tpu.memory_space<vmem>>, %arg7: memref<1x128xf32, #tpu.memory_space<vmem>>, %arg8: memref<128x128xbf16, #tpu.memory_space<vmem>>, %arg9: memref<1x128xf32, #tpu.memory_space<vmem>>, %arg10: memref<2x128xf32, #tpu.memory_space<vmem>>) attributes {dimension_semantics = [#tpu.dimension_semantics<parallel>], iteration_bounds = array<i64: 1>, scalar_prefetch = 0 : i64, scratch_operands = 0 : i64, tpu.core_type = #tpu.core_type<tc>, window_params = [{transform_indices = @transform_0, window_bounds = array<i64: 2, 784>}, {pipeline_mode = #tpu.pipeline_mode<synchronous>, transform_indices = @transform_1, window_bounds = array<i64: 784, 128>}, {pipeline_mode = #tpu.pipeline_mode<synchronous>, transform_indices = @transform_2, window_bounds = array<i64: 1, 128>}, {pipeline_mode = #tpu.pipeline_mode<synchronous>, transform_indices = @transform_3, window_bounds = array<i64: 128, 128>}, {pipeline_mode = #tpu.pipeline_mode<synchronous>, transform_indices = @transform_4, window_bounds = array<i64: 1, 128>}, {pipeline_mode = #tpu.pipeline_mode<synchronous>, transform_indices = @transform_5, window_bounds = array<i64: 128, 128>}, {pipeline_mode = #tpu.pipeline_mode<synchronous>, transform_indices = @transform_6, window_bounds = array<i64: 1, 128>}, {pipeline_mode = #tpu.pipeline_mode<synchronous>, transform_indices = @transform_7, window_bounds = array<i64: 128, 128>}, {pipeline_mode = #tpu.pipeline_mode<synchronous>, transform_indices = @transform_8, window_bounds = array<i64: 1, 128>}, {transform_indices = @transform_9, window_bounds = array<i64: 2, 128>}]} {
    %c0 = arith.constant 0 : index
    %c0_0 = arith.constant 0 : index
    %0 = vector.load %arg1[%c0, %c0_0] : memref<2x784xf32, #tpu.memory_space<vmem>>, vector<2x784xf32>
    %1 = arith.truncf %0 : vector<2x784xf32> to vector<2x784xbf16>
    %c0_1 = arith.constant 0 : index
    %c0_2 = arith.constant 0 : index
    %2 = vector.load %arg2[%c0_1, %c0_2] : memref<784x128xbf16, #tpu.memory_space<vmem>>, vector<784x128xbf16>
    %cst = arith.constant dense<0.000000e+00> : vector<2x128xf32>
    %3 = tpu.matmul %1, %2, %cst {dimension_numbers = #tpu.dot_dimension_numbers<[1], [0], [0], [1], [0, 0, 1, 1], [], []>} : vector<2x784xbf16>, vector<784x128xbf16>, vector<2x128xf32> -> vector<2x128xf32>
    %c0_3 = arith.constant 0 : index
    %c0_4 = arith.constant 0 : index
    %4 = vector.load %arg3[%c0_3, %c0_4] : memref<1x128xf32, #tpu.memory_space<vmem>>, vector<1x128xf32>
    %5 = vector.broadcast %4 : vector<1x128xf32> to vector<2x128xf32>
    %6 = arith.addf %3, %5 : vector<2x128xf32>
    %cst_5 = arith.constant 0.000000e+00 : f32
    %7 = vector.broadcast %cst_5 : f32 to vector<2x128xf32>
    %8 = arith.maximumf %6, %7 : vector<2x128xf32>
    %9 = arith.truncf %8 : vector<2x128xf32> to vector<2x128xbf16>
    %c0_6 = arith.constant 0 : index
    %c0_7 = arith.constant 0 : index
    %10 = vector.load %arg4[%c0_6, %c0_7] : memref<128x128xbf16, #tpu.memory_space<vmem>>, vector<128x128xbf16>
    %cst_8 = arith.constant dense<0.000000e+00> : vector<2x128xf32>
    %11 = tpu.matmul %9, %10, %cst_8 {dimension_numbers = #tpu.dot_dimension_numbers<[1], [0], [0], [1], [0, 0, 1, 1], [], []>} : vector<2x128xbf16>, vector<128x128xbf16>, vector<2x128xf32> -> vector<2x128xf32>
    %c0_9 = arith.constant 0 : index
    %c0_10 = arith.constant 0 : index
    %12 = vector.load %arg5[%c0_9, %c0_10] : memref<1x128xf32, #tpu.memory_space<vmem>>, vector<1x128xf32>
    %13 = vector.broadcast %12 : vector<1x128xf32> to vector<2x128xf32>
    %14 = arith.addf %11, %13 : vector<2x128xf32>
    %cst_11 = arith.constant 0.000000e+00 : f32
    %15 = vector.broadcast %cst_11 : f32 to vector<2x128xf32>
    %16 = arith.maximumf %14, %15 : vector<2x128xf32>
    %17 = arith.truncf %16 : vector<2x128xf32> to vector<2x128xbf16>
    %c0_12 = arith.constant 0 : index
    %c0_13 = arith.constant 0 : index
    %18 = vector.load %arg6[%c0_12, %c0_13] : memref<128x128xbf16, #tpu.memory_space<vmem>>, vector<128x128xbf16>
    %cst_14 = arith.constant dense<0.000000e+00> : vector<2x128xf32>
    %19 = tpu.matmul %17, %18, %cst_14 {dimension_numbers = #tpu.dot_dimension_numbers<[1], [0], [0], [1], [0, 0, 1, 1], [], []>} : vector<2x128xbf16>, vector<128x128xbf16>, vector<2x128xf32> -> vector<2x128xf32>
    %c0_15 = arith.constant 0 : index
    %c0_16 = arith.constant 0 : index
    %20 = vector.load %arg7[%c0_15, %c0_16] : memref<1x128xf32, #tpu.memory_space<vmem>>, vector<1x128xf32>
    %21 = vector.broadcast %20 : vector<1x128xf32> to vector<2x128xf32>
    %22 = arith.addf %19, %21 : vector<2x128xf32>
    %cst_17 = arith.constant 0.000000e+00 : f32
    %23 = vector.broadcast %cst_17 : f32 to vector<2x128xf32>
    %24 = arith.maximumf %22, %23 : vector<2x128xf32>
    %25 = arith.truncf %24 : vector<2x128xf32> to vector<2x128xbf16>
    %c0_18 = arith.constant 0 : index
    %c0_19 = arith.constant 0 : index
    %26 = vector.load %arg8[%c0_18, %c0_19] : memref<128x128xbf16, #tpu.memory_space<vmem>>, vector<128x128xbf16>
    %cst_20 = arith.constant dense<0.000000e+00> : vector<2x128xf32>
    %27 = tpu.matmul %25, %26, %cst_20 {dimension_numbers = #tpu.dot_dimension_numbers<[1], [0], [0], [1], [0, 0, 1, 1], [], []>} : vector<2x128xbf16>, vector<128x128xbf16>, vector<2x128xf32> -> vector<2x128xf32>
    %c0_21 = arith.constant 0 : index
    %c0_22 = arith.constant 0 : index
    %28 = vector.load %arg9[%c0_21, %c0_22] : memref<1x128xf32, #tpu.memory_space<vmem>>, vector<1x128xf32>
    %29 = vector.broadcast %28 : vector<1x128xf32> to vector<2x128xf32>
    %30 = arith.addf %27, %29 : vector<2x128xf32>
    %c0_23 = arith.constant 0 : index
    %c0_24 = arith.constant 0 : index
    %31 = vector.load %arg10[%c0_23, %c0_24] : memref<2x128xf32, #tpu.memory_space<vmem>>, vector<2x128xf32>
    tpu.vector_store %arg10[%c0_23, %c0_24], %30 {strides = array<i32>} : memref<2x128xf32, #tpu.memory_space<vmem>>, vector<2x128xf32>,
    return
  }
  func.func @transform_0(%arg0: i32) -> (i32, i32) {
    %c0_i32 = arith.constant 0 : i32
    %c0_i32_0 = arith.constant 0 : i32
    return %arg0, %c0_i32 : i32, i32
  }
  func.func @transform_1(%arg0: i32) -> (i32, i32) {
    %c0_i32 = arith.constant 0 : i32
    %c0_i32_0 = arith.constant 0 : i32
    %c0_i32_1 = arith.constant 0 : i32
    return %c0_i32, %c0_i32_0 : i32, i32
  }
  func.func @transform_2(%arg0: i32) -> (i32, i32) {
    %c0_i32 = arith.constant 0 : i32
    %c0_i32_0 = arith.constant 0 : i32
    %c0_i32_1 = arith.constant 0 : i32
    return %c0_i32, %c0_i32_0 : i32, i32
  }
  func.func @transform_3(%arg0: i32) -> (i32, i32) {
    %c0_i32 = arith.constant 0 : i32
    %c0_i32_0 = arith.constant 0 : i32
    %c0_i32_1 = arith.constant 0 : i32
    return %c0_i32, %c0_i32_0 : i32, i32
  }
  func.func @transform_4(%arg0: i32) -> (i32, i32) {
    %c0_i32 = arith.constant 0 : i32
    %c0_i32_0 = arith.constant 0 : i32
    %c0_i32_1 = arith.constant 0 : i32
    return %c0_i32, %c0_i32_0 : i32, i32
  }
  func.func @transform_5(%arg0: i32) -> (i32, i32) {
    %c0_i32 = arith.constant 0 : i32
    %c0_i32_0 = arith.constant 0 : i32
    %c0_i32_1 = arith.constant 0 : i32
    return %c0_i32, %c0_i32_0 : i32, i32
  }
  func.func @transform_6(%arg0: i32) -> (i32, i32) {
    %c0_i32 = arith.constant 0 : i32
    %c0_i32_0 = arith.constant 0 : i32
    %c0_i32_1 = arith.constant 0 : i32
    return %c0_i32, %c0_i32_0 : i32, i32
  }
  func.func @transform_7(%arg0: i32) -> (i32, i32) {
    %c0_i32 = arith.constant 0 : i32
    %c0_i32_0 = arith.constant 0 : i32
    %c0_i32_1 = arith.constant 0 : i32
    return %c0_i32, %c0_i32_0 : i32, i32
  }
  func.func @transform_8(%arg0: i32) -> (i32, i32) {
    %c0_i32 = arith.constant 0 : i32
    %c0_i32_0 = arith.constant 0 : i32
    %c0_i32_1 = arith.constant 0 : i32
    return %c0_i32, %c0_i32_0 : i32, i32
  }
  func.func @transform_9(%arg0: i32) -> (i32, i32) {
    %c0_i32 = arith.constant 0 : i32
    %c0_i32_0 = arith.constant 0 : i32
    return %arg0, %c0_i32 : i32, i32
  }
}

</mosaic_0001>

<llo_original>
// kernel: mnist_net_forward.1
$region0: #{mnist_net_forward.1}
  #allocation0 [shape = 'u32[]', space=smem, size = 0x4, offset = 0x4, fixed_abs, tag = 'smem constant byte address 0x4 - core index']
  #allocation1 [shape = 'u32[144,128]{1,0:T(1,128)}', space=vmem, size = 0x12000, scoped, tag = 'internal scratch']
  %s0 = inlined_call_operand.vmem [shape: f32[2,784], index: 0, kind: input, shape index: {}]
  %s1 = inlined_call_operand.hbm [shape: bf16[784,128], index: 1, kind: input, shape index: {}]
  %s2 = inlined_call_operand.vmem [shape: f32[1,128], index: 2, kind: input, shape index: {}]
  %s3 = inlined_call_operand.vmem [shape: bf16[128,128], index: 3, kind: input, shape index: {}]
  %s4 = inlined_call_operand.vmem [shape: f32[1,128], index: 4, kind: input, shape index: {}]
  %s5 = inlined_call_operand.vmem [shape: bf16[128,128], index: 5, kind: input, shape index: {}]
  %s6 = inlined_call_operand.vmem [shape: f32[1,128], index: 6, kind: input, shape index: {}]
  %s7 = inlined_call_operand.vmem [shape: bf16[128,128], index: 7, kind: input, shape index: {}]
  %s8 = inlined_call_operand.vmem [shape: f32[1,128], index: 8, kind: input, shape index: {}]
  %s9 = inlined_call_operand.hbm [shape: f32[2,128], index: 9, kind: output, shape index: {}]
  %s10 = sld [smem:[#allocation0]]
  $region50: #{mnist_net_forward.1} parent=0
    _
  %s12 = ssub.s32 1, %s10
  %s13 = scalar_select 0, %s12, %s10
  $region1: #{mnist_net_forward.1} parent=0
    #allocation2 [shape = 'u8[200704]{0}', space=vmem, size = 0x31000, scoped, tag = 'input window, operand 1, single buffered']
    #allocation3 [shape = 's32[1]{0}', space=sflag, size = 0x4, scoped, tag = 'scoped memory for mnist_net_forward.1']
    #allocation4 [shape = 's32[1]{0}', space=sflag, size = 0x4, scoped, tag = 'scoped memory for mnist_net_forward.1']
    #allocation5 [shape = 'u8[1024]{0}', space=vmem, size = 0x400, scoped, tag = 'output window, operand 0, single buffered']
    %14 = vsyncpa [#allocation3], 0
    %15 = vsyncpa [#allocation4], 0
    // Predicated region
    $region2: #{mnist_net_forward.1} parent=1 // pred_check
      _
    $region3: #{mnist_net_forward.1} parent=1 // pred_check_branch
      %17 = sbr.rel (0) target = $region5
    $region4: #{mnist_net_forward.1} parent=1 // pred_region
      _
    $region5: #{mnist_net_forward.1} parent=1 // pred_fallthru
      _
    // Predicated region
    $region6: #{mnist_net_forward.1} parent=1 // pred_check
      _
    $region7: #{mnist_net_forward.1} parent=1 // pred_check_branch
      %19 = sbr.rel (0) target = $region9
    $region8: #{mnist_net_forward.1} parent=1 // pred_region
      %s21 = ssub.s32 6272, 6272
      %22 = vsyncadd [#allocation3], %s21
      %s23 = sshll.u32 [#allocation2], 4
      %s24 = int_to_ptr.vmem [resolvable:$true] %s23
      %29 = dma.hbm_to_vmem [thread:$0]  %s1, 6272, %s24, [#allocation3], 64, 64, 4
    $region9: #{mnist_net_forward.1} parent=1 // pred_fallthru
      _
    // Predicated region
    $region10: #{mnist_net_forward.1} parent=1 // pred_check
      _
    $region11: #{mnist_net_forward.1} parent=1 // pred_check_branch
      %31 = sbr.rel (0) target = $region13
    $region12: #{mnist_net_forward.1} parent=1 // pred_region
      _
    $region13: #{mnist_net_forward.1} parent=1 // pred_fallthru
      _
    // Predicated region
    $region14: #{mnist_net_forward.1} parent=1 // pred_check
      _
    $region15: #{mnist_net_forward.1} parent=1 // pred_check_branch
      %33 = sbr.rel (0) target = $region17
    $region16: #{mnist_net_forward.1} parent=1 // pred_region
      _
    $region17: #{mnist_net_forward.1} parent=1 // pred_fallthru
      _
    // Predicated region
    $region18: #{mnist_net_forward.1} parent=1 // pred_check
      _
    $region19: #{mnist_net_forward.1} parent=1 // pred_check_branch
      %35 = sbr.rel (0) target = $region21
    $region20: #{mnist_net_forward.1} parent=1 // pred_region
      _
    $region21: #{mnist_net_forward.1} parent=1 // pred_fallthru
      _
    // Predicated region
    $region22: #{mnist_net_forward.1} parent=1 // pred_check
      _
    $region23: #{mnist_net_forward.1} parent=1 // pred_check_branch
      %37 = sbr.rel (0) target = $region25
    $region24: #{mnist_net_forward.1} parent=1 // pred_region
      _
    $region25: #{mnist_net_forward.1} parent=1 // pred_fallthru
      _
    // Predicated region
    $region26: #{mnist_net_forward.1} parent=1 // pred_check
      _
    $region27: #{mnist_net_forward.1} parent=1 // pred_check_branch
      %39 = sbr.rel (0) target = $region29
    $region28: #{mnist_net_forward.1} parent=1 // pred_region
      _
    $region29: #{mnist_net_forward.1} parent=1 // pred_fallthru
      _
    // Predicated region
    $region30: #{mnist_net_forward.1} parent=1 // pred_check
      _
    $region31: #{mnist_net_forward.1} parent=1 // pred_check_branch
      %41 = sbr.rel (0) target = $region33
    $region32: #{mnist_net_forward.1} parent=1 // pred_region
      _
    $region33: #{mnist_net_forward.1} parent=1 // pred_fallthru
      _
    // Predicated region
    $region34: #{mnist_net_forward.1} parent=1 // pred_check
      _
    $region35: #{mnist_net_forward.1} parent=1 // pred_check_branch
      %43 = sbr.rel (0) target = $region37
    $region36: #{mnist_net_forward.1} parent=1 // pred_region
      _
    $region37: #{mnist_net_forward.1} parent=1 // pred_fallthru
      _
    // Predicated region
    $region38: #{mnist_net_forward.1} parent=1 // pred_check
      _
    $region39: #{mnist_net_forward.1} parent=1 // pred_check_branch
      %45 = sbr.rel (0) target = $region41
    $region40: #{mnist_net_forward.1} parent=1 // pred_region
      %46 = dma.done [#allocation3], 6272
    $region41: #{mnist_net_forward.1} parent=1 // pred_fallthru
      _
    %v48 = vld [vmem:[%s0] sm:$0xff]
    %v49 = vld [vmem:[%s0 + $0x8] sm:$0x3f]
    %v52 = vcombine.high %v48, %v48
    %v54 = vunpack.c.l.s4 1983009808
    %v55 = vunpack.c.0.s8 %v54
    %v56 = vlaneseq
    %v57 = vshrl.u32 %v56, 7
    %v58 = vsub.s32 %v55, %v57
    %v59 = vrot.slane %v48, %v58
    %v61 = vunpack.c.l.s4 1983009808
    %v62 = vunpack.c.0.s8 %v61
    %v63 = vlaneseq
    %v64 = vshrl.u32 %v63, 7
    %v65 = vsub.s32 %v62, %v64
    %v66 = vrot.slane %v52, %v65
    %v67 = vcombine.high %v59, %v59
    %v68 = vcombine.high %v66, %v66
    %v69 = vcombine.high %v49, %v49
    %v71 = vunpack.c.l.s4 1983009808
    %v72 = vunpack.c.0.s8 %v71
    %v73 = vlaneseq
    %v74 = vshrl.u32 %v73, 7
    %v75 = vsub.s32 %v72, %v74
    %v76 = vrot.slane %v49, %v75
    %v78 = vunpack.c.l.s4 1983009808
    %v79 = vunpack.c.0.s8 %v78
    %v80 = vlaneseq
    %v81 = vshrl.u32 %v80, 7
    %v82 = vsub.s32 %v79, %v81
    %v83 = vrot.slane %v69, %v82
    %v84 = vcombine.high %v76, %v76
    %v92 = vpack.c.bf16 %v59, %v59
    %v93 = vpack.c.bf16 %v67, %v67
    %v94 = vpack.c.bf16 %v66, %v66
    %v95 = vpack.c.bf16 %v68, %v68
    %v96 = vpack.c.bf16 %v76, %v76
    %v97 = vpack.c.bf16 %v84, %v84
    %v98 = vpack.c.bf16 %v83, %v83
    %v99 = vld [vmem:[#allocation2] sm:$0xf]
    %v100 = vld [vmem:[#allocation2 + $0x4] sm:$0xf]
    %v101 = vld [vmem:[#allocation2 + $0x8] sm:$0xf]
    %v102 = vld [vmem:[#allocation2 + $0xc] sm:$0xf]
    %v103 = vld [vmem:[#allocation2 + $0x10] sm:$0xf]
    %v104 = vld [vmem:[#allocation2 + $0x14] sm:$0xf]
    %v105 = vld [vmem:[#allocation2 + $0x18] sm:$0xf]
    %v106 = vld [vmem:[#allocation2 + $0x1c] sm:$0xf]
    %v107 = vld [vmem:[#allocation2 + $0x20] sm:$0xf]
    %v108 = vld [vmem:[#allocation2 + $0x24] sm:$0xf]
    %v109 = vld [vmem:[#allocation2 + $0x28] sm:$0xf]
    %v110 = vld [vmem:[#allocation2 + $0x2c] sm:$0xf]
    %v111 = vld [vmem:[#allocation2 + $0x30] sm:$0xf]
    %v112 = vld [vmem:[#allocation2 + $0x34] sm:$0xf]
    %v113 = vld [vmem:[#allocation2 + $0x38] sm:$0xf]
    %v114 = vld [vmem:[#allocation2 + $0x3c] sm:$0xf]
    %v115 = vld [vmem:[#allocation2 + $0x40] sm:$0xf]
    %v116 = vld [vmem:[#allocation2 + $0x44] sm:$0xf]
    %v117 = vld [vmem:[#allocation2 + $0x48] sm:$0xf]
    %v118 = vld [vmem:[#allocation2 + $0x4c] sm:$0xf]
    %v119 = vld [vmem:[#allocation2 + $0x50] sm:$0xf]
    %v120 = vld [vmem:[#allocation2 + $0x54] sm:$0xf]
    %v121 = vld [vmem:[#allocation2 + $0x58] sm:$0xf]
    %v122 = vld [vmem:[#allocation2 + $0x5c] sm:$0xf]
    %v123 = vld [vmem:[#allocation2 + $0x60] sm:$0xf]
    %v124 = vld [vmem:[#allocation2 + $0x64] sm:$0xf]
    %v125 = vld [vmem:[#allocation2 + $0x68] sm:$0xf]
    %v126 = vld [vmem:[#allocation2 + $0x6c] sm:$0xf]
    %v127 = vld [vmem:[#allocation2 + $0x70] sm:$0xf]
    %v128 = vld [vmem:[#allocation2 + $0x74] sm:$0xf]
    %v129 = vld [vmem:[#allocation2 + $0x78] sm:$0xf]
    %v130 = vld [vmem:[#allocation2 + $0x7c] sm:$0xf]
    %v131 = vld [vmem:[#allocation2 + $0x80] sm:$0xf]
    %v132 = vld [vmem:[#allocation2 + $0x84] sm:$0xf]
    %v133 = vld [vmem:[#allocation2 + $0x88] sm:$0xf]
    %v134 = vld [vmem:[#allocation2 + $0x8c] sm:$0xf]
    %v135 = vld [vmem:[#allocation2 + $0x90] sm:$0xf]
    %v136 = vld [vmem:[#allocation2 + $0x94] sm:$0xf]
    %v137 = vld [vmem:[#allocation2 + $0x98] sm:$0xf]
    %v138 = vld [vmem:[#allocation2 + $0x9c] sm:$0xf]
    %v139 = vld [vmem:[#allocation2 + $0xa0] sm:$0xf]
    %v140 = vld [vmem:[#allocation2 + $0xa4] sm:$0xf]
    %v141 = vld [vmem:[#allocation2 + $0xa8] sm:$0xf]
    %v142 = vld [vmem:[#allocation2 + $0xac] sm:$0xf]
    %v143 = vld [vmem:[#allocation2 + $0xb0] sm:$0xf]
    %v144 = vld [vmem:[#allocation2 + $0xb4] sm:$0xf]
    %v145 = vld [vmem:[#allocation2 + $0xb8] sm:$0xf]
    %v146 = vld [vmem:[#allocation2 + $0xbc] sm:$0xf]
    %v147 = vld [vmem:[#allocation2 + $0xc0] sm:$0xf]
    %v148 = vld [vmem:[#allocation2 + $0xc4] sm:$0xf]
    %v149 = vld [vmem:[#allocation2 + $0xc8] sm:$0xf]
    %v150 = vld [vmem:[#allocation2 + $0xcc] sm:$0xf]
    %v151 = vld [vmem:[#allocation2 + $0xd0] sm:$0xf]
    %v152 = vld [vmem:[#allocation2 + $0xd4] sm:$0xf]
    %v153 = vld [vmem:[#allocation2 + $0xd8] sm:$0xf]
    %v154 = vld [vmem:[#allocation2 + $0xdc] sm:$0xf]
    %v155 = vld [vmem:[#allocation2 + $0xe0] sm:$0xf]
    %v156 = vld [vmem:[#allocation2 + $0xe4] sm:$0xf]
    %v157 = vld [vmem:[#allocation2 + $0xe8] sm:$0xf]
    %v158 = vld [vmem:[#allocation2 + $0xec] sm:$0xf]
    %v159 = vld [vmem:[#allocation2 + $0xf0] sm:$0xf]
    %v160 = vld [vmem:[#allocation2 + $0xf4] sm:$0xf]
    %v161 = vld [vmem:[#allocation2 + $0xf8] sm:$0xf]
    %v162 = vld [vmem:[#allocation2 + $0xfc] sm:$0xf]
    %v163 = vld [vmem:[#allocation2 + $0x100] sm:$0xf]
    %v164 = vld [vmem:[#allocation2 + $0x104] sm:$0xf]
    %v165 = vld [vmem:[#allocation2 + $0x108] sm:$0xf]
    %v166 = vld [vmem:[#allocation2 + $0x10c] sm:$0xf]
    %v167 = vld [vmem:[#allocation2 + $0x110] sm:$0xf]
    %v168 = vld [vmem:[#allocation2 + $0x114] sm:$0xf]
    %v169 = vld [vmem:[#allocation2 + $0x118] sm:$0xf]
    %v170 = vld [vmem:[#allocation2 + $0x11c] sm:$0xf]
    %v171 = vld [vmem:[#allocation2 + $0x120] sm:$0xf]
    %v172 = vld [vmem:[#allocation2 + $0x124] sm:$0xf]
    %v173 = vld [vmem:[#allocation2 + $0x128] sm:$0xf]
    %v174 = vld [vmem:[#allocation2 + $0x12c] sm:$0xf]
    %v175 = vld [vmem:[#allocation2 + $0x130] sm:$0xf]
    %v176 = vld [vmem:[#allocation2 + $0x134] sm:$0xf]
    %v177 = vld [vmem:[#allocation2 + $0x138] sm:$0xf]
    %v178 = vld [vmem:[#allocation2 + $0x13c] sm:$0xf]
    %v179 = vld [vmem:[#allocation2 + $0x140] sm:$0xf]
    %v180 = vld [vmem:[#allocation2 + $0x144] sm:$0xf]
    %v181 = vld [vmem:[#allocation2 + $0x148] sm:$0xf]
    %v182 = vld [vmem:[#allocation2 + $0x14c] sm:$0xf]
    %v183 = vld [vmem:[#allocation2 + $0x150] sm:$0xf]
    %v184 = vld [vmem:[#allocation2 + $0x154] sm:$0xf]
    %v185 = vld [vmem:[#allocation2 + $0x158] sm:$0xf]
    %v186 = vld [vmem:[#allocation2 + $0x15c] sm:$0xf]
    %v187 = vld [vmem:[#allocation2 + $0x160] sm:$0xf]
    %v188 = vld [vmem:[#allocation2 + $0x164] sm:$0xf]
    %v189 = vld [vmem:[#allocation2 + $0x168] sm:$0xf]
    %v190 = vld [vmem:[#allocation2 + $0x16c] sm:$0xf]
    %v191 = vld [vmem:[#allocation2 + $0x170] sm:$0xf]
    %v192 = vld [vmem:[#allocation2 + $0x174] sm:$0xf]
    %v193 = vld [vmem:[#allocation2 + $0x178] sm:$0xf]
    %v194 = vld [vmem:[#allocation2 + $0x17c] sm:$0xf]
    %v195 = vld [vmem:[#allocation2 + $0x180] sm:$0xf]
    %v196 = vld [vmem:[#allocation2 + $0x184] sm:$0xf]
    %v197 = vld [vmem:[%s2] sm:$0x1]
    %v199 = vlaneseq
    %v200 = vshrl.u32 %v199, 7
    %v201 = vsub.s32 0, %v200
    %v202 = vrot.slane %v197, %v201
    %v302 = vunpack.c.l.b16 %v99
    %v303 = vunpack.c.l.b16 %v100
    %v304 = vunpack.c.l.b16 %v101
    %v305 = vunpack.c.l.b16 %v102
    %v306 = vunpack.c.l.b16 %v103
    %v307 = vunpack.c.l.b16 %v104
    %v308 = vunpack.c.l.b16 %v105
    %v309 = vunpack.c.l.b16 %v106
    %v310 = vunpack.c.l.b16 %v107
    %v311 = vunpack.c.l.b16 %v108
    %v312 = vunpack.c.l.b16 %v109
    %v313 = vunpack.c.l.b16 %v110
    %v314 = vunpack.c.l.b16 %v111
    %v315 = vunpack.c.l.b16 %v112
    %v316 = vunpack.c.l.b16 %v113
    %v317 = vunpack.c.l.b16 %v114
    %v318 = vunpack.c.l.b16 %v115
    %v319 = vunpack.c.l.b16 %v116
    %v320 = vunpack.c.l.b16 %v117
    %v321 = vunpack.c.l.b16 %v118
    %v322 = vunpack.c.l.b16 %v119
    %v323 = vunpack.c.l.b16 %v120
    %v324 = vunpack.c.l.b16 %v121
    %v325 = vunpack.c.l.b16 %v122
    %v326 = vunpack.c.l.b16 %v123
    %v327 = vunpack.c.l.b16 %v124
    %v328 = vunpack.c.l.b16 %v125
    %v329 = vunpack.c.l.b16 %v126
    %v330 = vunpack.c.l.b16 %v127
    %v331 = vunpack.c.l.b16 %v128
    %v332 = vunpack.c.l.b16 %v129
    %v333 = vunpack.c.l.b16 %v130
    %v334 = vunpack.c.l.b16 %v131
    %v335 = vunpack.c.l.b16 %v132
    %v336 = vunpack.c.l.b16 %v133
    %v337 = vunpack.c.l.b16 %v134
    %v338 = vunpack.c.l.b16 %v135
    %v339 = vunpack.c.l.b16 %v136
    %v340 = vunpack.c.l.b16 %v137
    %v341 = vunpack.c.l.b16 %v138
    %v342 = vunpack.c.l.b16 %v139
    %v343 = vunpack.c.l.b16 %v140
    %v344 = vunpack.c.l.b16 %v141
    %v345 = vunpack.c.l.b16 %v142
    %v346 = vunpack.c.l.b16 %v143
    %v347 = vunpack.c.l.b16 %v144
    %v348 = vunpack.c.l.b16 %v145
    %v349 = vunpack.c.l.b16 %v146
    %v350 = vunpack.c.l.b16 %v147
    %v351 = vunpack.c.l.b16 %v148
    %v352 = vunpack.c.l.b16 %v149
    %v353 = vunpack.c.l.b16 %v150
    %v354 = vunpack.c.l.b16 %v151
    %v355 = vunpack.c.l.b16 %v152
    %v356 = vunpack.c.l.b16 %v153
    %v357 = vunpack.c.l.b16 %v154
    %v358 = vunpack.c.l.b16 %v155
    %v359 = vunpack.c.l.b16 %v156
    %v360 = vunpack.c.l.b16 %v157
    %v361 = vunpack.c.l.b16 %v158
    %v362 = vunpack.c.l.b16 %v159
    %v363 = vunpack.c.l.b16 %v160
    %v364 = vunpack.c.l.b16 %v161
    %v365 = vunpack.c.l.b16 %v162
    %v366 = vunpack.c.l.b16 %v163
    %v367 = vunpack.c.l.b16 %v164
    %v368 = vunpack.c.l.b16 %v165
    %v369 = vunpack.c.l.b16 %v166
    %v370 = vunpack.c.l.b16 %v167
    %v371 = vunpack.c.l.b16 %v168
    %v372 = vunpack.c.l.b16 %v169
    %v373 = vunpack.c.l.b16 %v170
    %v374 = vunpack.c.l.b16 %v171
    %v375 = vunpack.c.l.b16 %v172
    %v376 = vunpack.c.l.b16 %v173
    %v377 = vunpack.c.l.b16 %v174
    %v378 = vunpack.c.l.b16 %v175
    %v379 = vunpack.c.l.b16 %v176
    %v380 = vunpack.c.l.b16 %v177
    %v381 = vunpack.c.l.b16 %v178
    %v382 = vunpack.c.l.b16 %v179
    %v383 = vunpack.c.l.b16 %v180
    %v384 = vunpack.c.l.b16 %v181
    %v385 = vunpack.c.l.b16 %v182
    %v386 = vunpack.c.l.b16 %v183
    %v387 = vunpack.c.l.b16 %v184
    %v388 = vunpack.c.l.b16 %v185
    %v389 = vunpack.c.l.b16 %v186
    %v390 = vunpack.c.l.b16 %v187
    %v391 = vunpack.c.l.b16 %v188
    %v392 = vunpack.c.l.b16 %v189
    %v393 = vunpack.c.l.b16 %v190
    %v394 = vunpack.c.l.b16 %v191
    %v395 = vunpack.c.l.b16 %v192
    %v396 = vunpack.c.l.b16 %v193
    %v397 = vunpack.c.l.b16 %v194
    %v398 = vunpack.c.l.b16 %v195
    %v399 = vunpack.c.l.b16 %v196
    %v400 = vpack.c.b16 %v303, %v302
    %v401 = vpack.c.b16 %v305, %v304
    %v402 = vpack.c.b16 %v307, %v306
    %v403 = vpack.c.b16 %v309, %v308
    %v404 = vpack.c.b16 %v311, %v310
    %v405 = vpack.c.b16 %v313, %v312
    %v406 = vpack.c.b16 %v315, %v314
    %v407 = vpack.c.b16 %v317, %v316
    %v408 = vpack.c.b16 %v319, %v318
    %v409 = vpack.c.b16 %v321, %v320
    %v410 = vpack.c.b16 %v323, %v322
    %v411 = vpack.c.b16 %v325, %v324
    %v412 = vpack.c.b16 %v327, %v326
    %v413 = vpack.c.b16 %v329, %v328
    %v414 = vpack.c.b16 %v331, %v330
    %v415 = vpack.c.b16 %v333, %v332
    %v416 = vpack.c.b16 %v335, %v334
    %v417 = vpack.c.b16 %v337, %v336
    %v418 = vpack.c.b16 %v339, %v338
    %v419 = vpack.c.b16 %v341, %v340
    %v420 = vpack.c.b16 %v343, %v342
    %v421 = vpack.c.b16 %v345, %v344
    %v422 = vpack.c.b16 %v347, %v346
    %v423 = vpack.c.b16 %v349, %v348
    %v424 = vpack.c.b16 %v351, %v350
    %v425 = vpack.c.b16 %v353, %v352
    %v426 = vpack.c.b16 %v355, %v354
    %v427 = vpack.c.b16 %v357, %v356
    %v428 = vpack.c.b16 %v359, %v358
    %v429 = vpack.c.b16 %v361, %v360
    %v430 = vpack.c.b16 %v363, %v362
    %v431 = vpack.c.b16 %v365, %v364
    %v432 = vpack.c.b16 %v367, %v366
    %v433 = vpack.c.b16 %v369, %v368
    %v434 = vpack.c.b16 %v371, %v370
    %v435 = vpack.c.b16 %v373, %v372
    %v436 = vpack.c.b16 %v375, %v374
    %v437 = vpack.c.b16 %v377, %v376
    %v438 = vpack.c.b16 %v379, %v378
    %v439 = vpack.c.b16 %v381, %v380
    %v440 = vpack.c.b16 %v383, %v382
    %v441 = vpack.c.b16 %v385, %v384
    %v442 = vpack.c.b16 %v387, %v386
    %v443 = vpack.c.b16 %v389, %v388
    %v444 = vpack.c.b16 %v391, %v390
    %v445 = vpack.c.b16 %v393, %v392
    %v446 = vpack.c.b16 %v395, %v394
    %v447 = vpack.c.b16 %v397, %v396
    %v448 = vpack.c.b16 %v399, %v398
    %vm498 = vcmask 130048
    %v500 = vsel %vm498, %v98, 0
    %502 = vmatprep.subr.bf16.mxu0 0
    %503 = vmatpush1.bf16.msra.mxu0 %v407
    %504 = vmatprep.subr.bf16.mxu0 0
    %505 = vmatpush1.bf16.msra.mxu0 %v406
    %506 = vmatprep.subr.bf16.mxu0 0
    %507 = vmatpush1.bf16.msra.mxu0 %v405
    %508 = vmatprep.subr.bf16.mxu0 0
    %509 = vmatpush1.bf16.msra.mxu0 %v404
    %510 = vmatprep.subr.bf16.mxu0 0
    %511 = vmatpush1.bf16.msra.mxu0 %v403
    %512 = vmatprep.subr.bf16.mxu0 0
    %513 = vmatpush1.bf16.msra.mxu0 %v402
    %514 = vmatprep.subr.bf16.mxu0 0
    %515 = vmatpush1.bf16.msra.mxu0 %v401
    %516 = vmatprep.subr.bf16.mxu0 0
    %517 = vmatpush1.bf16.msra.mxu0 %v400
    %518 = vmatprep.subr.bf16.mxu0 0
    %519 = vmatpush2.bf16.msra.mxu0 %v415
    %520 = vmatprep.subr.bf16.mxu0 0
    %521 = vmatpush2.bf16.msra.mxu0 %v414
    %522 = vmatprep.subr.bf16.mxu0 0
    %523 = vmatpush2.bf16.msra.mxu0 %v413
    %524 = vmatprep.subr.bf16.mxu0 0
    %525 = vmatpush2.bf16.msra.mxu0 %v412
    %526 = vmatprep.subr.bf16.mxu0 0
    %527 = vmatpush2.bf16.msra.mxu0 %v411
    %528 = vmatprep.subr.bf16.mxu0 0
    %529 = vmatpush2.bf16.msra.mxu0 %v410
    %530 = vmatprep.subr.bf16.mxu0 0
    %531 = vmatpush2.bf16.msra.mxu0 %v409
    %532 = vmatprep.subr.bf16.mxu0 0
    %533 = vmatpush2.bf16.msra.mxu0 %v408
    %534 = vmatprep.mubr.bf16.mxu0 %v93
    %535 = vmatmul.mubr.bf16.gmra.mxu0 %v92
    %v536 = vpop.f32.mrf.mxu0
    %v537 = vadd.f32 %v202, %v536
    %v538 = vpop.f32.mrf.mxu0
    %v539 = vpop.f32.mrf.mxu0
    %v540 = vpop.f32.mrf.mxu0
    %541 = vdwg.mxu0
    %542 = vmatprep.subr.bf16.mxu0 0
    %543 = vmatpush1.bf16.msra.mxu0 %v423
    %544 = vmatprep.subr.bf16.mxu0 0
    %545 = vmatpush1.bf16.msra.mxu0 %v422
    %546 = vmatprep.subr.bf16.mxu0 0
    %547 = vmatpush1.bf16.msra.mxu0 %v421
    %548 = vmatprep.subr.bf16.mxu0 0
    %549 = vmatpush1.bf16.msra.mxu0 %v420
    %550 = vmatprep.subr.bf16.mxu0 0
    %551 = vmatpush1.bf16.msra.mxu0 %v419
    %552 = vmatprep.subr.bf16.mxu0 0
    %553 = vmatpush1.bf16.msra.mxu0 %v418
    %554 = vmatprep.subr.bf16.mxu0 0
    %555 = vmatpush1.bf16.msra.mxu0 %v417
    %556 = vmatprep.subr.bf16.mxu0 0
    %557 = vmatpush1.bf16.msra.mxu0 %v416
    %558 = vmatprep.subr.bf16.mxu0 0
    %559 = vmatpush2.bf16.msra.mxu0 %v431
    %560 = vmatprep.subr.bf16.mxu0 0
    %561 = vmatpush2.bf16.msra.mxu0 %v430
    %562 = vmatprep.subr.bf16.mxu0 0
    %563 = vmatpush2.bf16.msra.mxu0 %v429
    %564 = vmatprep.subr.bf16.mxu0 0
    %565 = vmatpush2.bf16.msra.mxu0 %v428
    %566 = vmatprep.subr.bf16.mxu0 0
    %567 = vmatpush2.bf16.msra.mxu0 %v427
    %568 = vmatprep.subr.bf16.mxu0 0
    %569 = vmatpush2.bf16.msra.mxu0 %v426
    %570 = vmatprep.subr.bf16.mxu0 0
    %571 = vmatpush2.bf16.msra.mxu0 %v425
    %572 = vmatprep.subr.bf16.mxu0 0
    %573 = vmatpush2.bf16.msra.mxu0 %v424
    %574 = vmatprep.mubr.bf16.mxu0 %v95
    %575 = vmatmul.mubr.bf16.gmra.mxu0 %v94
    %v576 = vpop.f32.mrf.mxu0
    %v577 = vadd.f32 %v537, %v576
    %v578 = vpop.f32.mrf.mxu0
    %v579 = vpop.f32.mrf.mxu0
    %v580 = vpop.f32.mrf.mxu0
    %581 = vdwg.mxu0
    %582 = vmatprep.subr.bf16.mxu0 0
    %583 = vmatpush1.bf16.msra.mxu0 %v439
    %584 = vmatprep.subr.bf16.mxu0 0
    %585 = vmatpush1.bf16.msra.mxu0 %v438
    %586 = vmatprep.subr.bf16.mxu0 0
    %587 = vmatpush1.bf16.msra.mxu0 %v437
    %588 = vmatprep.subr.bf16.mxu0 0
    %589 = vmatpush1.bf16.msra.mxu0 %v436
    %590 = vmatprep.subr.bf16.mxu0 0
    %591 = vmatpush1.bf16.msra.mxu0 %v435
    %592 = vmatprep.subr.bf16.mxu0 0
    %593 = vmatpush1.bf16.msra.mxu0 %v434
    %594 = vmatprep.subr.bf16.mxu0 0
    %595 = vmatpush1.bf16.msra.mxu0 %v433
    %596 = vmatprep.subr.bf16.mxu0 0
    %597 = vmatpush1.bf16.msra.mxu0 %v432
    %598 = vmatprep.subr.bf16.mxu0 0
    %599 = vmatpush2.bf16.msra.mxu0 %v447
    %600 = vmatprep.subr.bf16.mxu0 0
    %601 = vmatpush2.bf16.msra.mxu0 %v446
    %602 = vmatprep.subr.bf16.mxu0 0
    %603 = vmatpush2.bf16.msra.mxu0 %v445
    %604 = vmatprep.subr.bf16.mxu0 0
    %605 = vmatpush2.bf16.msra.mxu0 %v444
    %606 = vmatprep.subr.bf16.mxu0 0
    %607 = vmatpush2.bf16.msra.mxu0 %v443
    %608 = vmatprep.subr.bf16.mxu0 0
    %609 = vmatpush2.bf16.msra.mxu0 %v442
    %610 = vmatprep.subr.bf16.mxu0 0
    %611 = vmatpush2.bf16.msra.mxu0 %v441
    %612 = vmatprep.subr.bf16.mxu0 0
    %613 = vmatpush2.bf16.msra.mxu0 %v440
    %614 = vmatprep.mubr.bf16.mxu0 %v97
    %615 = vmatmul.mubr.bf16.gmra.mxu0 %v96
    %v616 = vpop.f32.mrf.mxu0
    %v617 = vadd.f32 %v577, %v616
    %v618 = vpop.f32.mrf.mxu0
    %v619 = vpop.f32.mrf.mxu0
    %v620 = vpop.f32.mrf.mxu0
    %621 = vdwg.mxu0
    %622 = vmatprep.subr.bf16.mxu0 0
    %623 = vmatpush1.bf16.msra.mxu0 0
    %624 = vmatprep.subr.bf16.mxu0 0
    %625 = vmatpush1.bf16.msra.mxu0 0
    %626 = vmatprep.subr.bf16.mxu0 0
    %627 = vmatpush1.bf16.msra.mxu0 0
    %628 = vmatprep.subr.bf16.mxu0 0
    %629 = vmatpush1.bf16.msra.mxu0 0
    %630 = vmatprep.subr.bf16.mxu0 0
    %631 = vmatpush1.bf16.msra.mxu0 0
    %632 = vmatprep.subr.bf16.mxu0 0
    %633 = vmatpush1.bf16.msra.mxu0 0
    %634 = vmatprep.subr.bf16.mxu0 0
    %635 = vmatpush1.bf16.msra.mxu0 0
    %636 = vmatprep.subr.bf16.mxu0 0
    %637 = vmatpush1.bf16.msra.mxu0 %v448
    %638 = vmatprep.subr.bf16.mxu0 0
    %639 = vmatpush2.bf16.msra.mxu0 0
    %640 = vmatprep.subr.bf16.mxu0 0
    %641 = vmatpush2.bf16.msra.mxu0 0
    %642 = vmatprep.subr.bf16.mxu0 0
    %643 = vmatpush2.bf16.msra.mxu0 0
    %644 = vmatprep.subr.bf16.mxu0 0
    %645 = vmatpush2.bf16.msra.mxu0 0
    %646 = vmatprep.subr.bf16.mxu0 0
    %647 = vmatpush2.bf16.msra.mxu0 0
    %648 = vmatprep.subr.bf16.mxu0 0
    %649 = vmatpush2.bf16.msra.mxu0 0
    %650 = vmatprep.subr.bf16.mxu0 0
    %651 = vmatpush2.bf16.msra.mxu0 0
    %652 = vmatprep.subr.bf16.mxu0 0
    %653 = vmatpush2.bf16.msra.mxu0 0
    %654 = vmatprep.mubr.bf16.mxu0 0
    %655 = vmatmul.mubr.bf16.gmra.mxu0 %v500
    %v656 = vpop.f32.mrf.mxu0
    %v657 = vadd.f32 %v617, %v656
    %v658 = vpop.f32.mrf.mxu0
    %v659 = vpop.f32.mrf.mxu0
    %v660 = vpop.f32.mrf.mxu0
    %661 = vdwg.mxu0
    %v662 = vmax.f32 %v657, 0.0
    %v663 = vpack.c.bf16 %v662, %v662
    %v664 = vld [vmem:[%s3] sm:$0xf]
    %v665 = vld [vmem:[%s3 + $0x4] sm:$0xf]
    %v666 = vld [vmem:[%s3 + $0x8] sm:$0xf]
    %v667 = vld [vmem:[%s3 + $0xc] sm:$0xf]
    %v668 = vld [vmem:[%s3 + $0x10] sm:$0xf]
    %v669 = vld [vmem:[%s3 + $0x14] sm:$0xf]
    %v670 = vld [vmem:[%s3 + $0x18] sm:$0xf]
    %v671 = vld [vmem:[%s3 + $0x1c] sm:$0xf]
    %v672 = vld [vmem:[%s3 + $0x20] sm:$0xf]
    %v673 = vld [vmem:[%s3 + $0x24] sm:$0xf]
    %v674 = vld [vmem:[%s3 + $0x28] sm:$0xf]
    %v675 = vld [vmem:[%s3 + $0x2c] sm:$0xf]
    %v676 = vld [vmem:[%s3 + $0x30] sm:$0xf]
    %v677 = vld [vmem:[%s3 + $0x34] sm:$0xf]
    %v678 = vld [vmem:[%s3 + $0x38] sm:$0xf]
    %v679 = vld [vmem:[%s3 + $0x3c] sm:$0xf]
    %v680 = vld [vmem:[%s4] sm:$0x1]
    %v682 = vlaneseq
    %v683 = vshrl.u32 %v682, 7
    %v684 = vsub.s32 0, %v683
    %v685 = vrot.slane %v680, %v684
    %v703 = vunpack.c.l.b16 %v664
    %v704 = vunpack.c.l.b16 %v665
    %v705 = vunpack.c.l.b16 %v666
    %v706 = vunpack.c.l.b16 %v667
    %v707 = vunpack.c.l.b16 %v668
    %v708 = vunpack.c.l.b16 %v669
    %v709 = vunpack.c.l.b16 %v670
    %v710 = vunpack.c.l.b16 %v671
    %v711 = vunpack.c.l.b16 %v672
    %v712 = vunpack.c.l.b16 %v673
    %v713 = vunpack.c.l.b16 %v674
    %v714 = vunpack.c.l.b16 %v675
    %v715 = vunpack.c.l.b16 %v676
    %v716 = vunpack.c.l.b16 %v677
    %v717 = vunpack.c.l.b16 %v678
    %v718 = vunpack.c.l.b16 %v679
    %v719 = vpack.c.b16 %v704, %v703
    %v720 = vpack.c.b16 %v706, %v705
    %v721 = vpack.c.b16 %v708, %v707
    %v722 = vpack.c.b16 %v710, %v709
    %v723 = vpack.c.b16 %v712, %v711
    %v724 = vpack.c.b16 %v714, %v713
    %v725 = vpack.c.b16 %v716, %v715
    %v726 = vpack.c.b16 %v718, %v717
    %735 = vmatprep.subr.bf16.mxu0 0
    %736 = vmatpush1.bf16.msra.mxu0 %v726
    %737 = vmatprep.subr.bf16.mxu0 0
    %738 = vmatpush1.bf16.msra.mxu0 %v725
    %739 = vmatprep.subr.bf16.mxu0 0
    %740 = vmatpush1.bf16.msra.mxu0 %v724
    %741 = vmatprep.subr.bf16.mxu0 0
    %742 = vmatpush1.bf16.msra.mxu0 %v723
    %743 = vmatprep.subr.bf16.mxu0 0
    %744 = vmatpush1.bf16.msra.mxu0 %v722
    %745 = vmatprep.subr.bf16.mxu0 0
    %746 = vmatpush1.bf16.msra.mxu0 %v721
    %747 = vmatprep.subr.bf16.mxu0 0
    %748 = vmatpush1.bf16.msra.mxu0 %v720
    %749 = vmatprep.subr.bf16.mxu0 0
    %750 = vmatpush1.bf16.msra.mxu0 %v719
    %751 = vmatprep.subr.bf16.mxu0 0
    %752 = vmatpush2.bf16.msra.mxu0 0
    %753 = vmatprep.subr.bf16.mxu0 0
    %754 = vmatpush2.bf16.msra.mxu0 0
    %755 = vmatprep.subr.bf16.mxu0 0
    %756 = vmatpush2.bf16.msra.mxu0 0
    %757 = vmatprep.subr.bf16.mxu0 0
    %758 = vmatpush2.bf16.msra.mxu0 0
    %759 = vmatprep.subr.bf16.mxu0 0
    %760 = vmatpush2.bf16.msra.mxu0 0
    %761 = vmatprep.subr.bf16.mxu0 0
    %762 = vmatpush2.bf16.msra.mxu0 0
    %763 = vmatprep.subr.bf16.mxu0 0
    %764 = vmatpush2.bf16.msra.mxu0 0
    %765 = vmatprep.subr.bf16.mxu0 0
    %766 = vmatpush2.bf16.msra.mxu0 0
    %767 = vmatprep.mubr.bf16.mxu0 0
    %768 = vmatmul.mubr.bf16.gmra.mxu0 %v663
    %v769 = vpop.f32.mrf.mxu0
    %v770 = vadd.f32 %v685, %v769
    %v771 = vpop.f32.mrf.mxu0
    %v772 = vpop.f32.mrf.mxu0
    %v773 = vpop.f32.mrf.mxu0
    %774 = vdwg.mxu0
    %v775 = vmax.f32 %v770, 0.0
    %v776 = vpack.c.bf16 %v775, %v775
    %v777 = vld [vmem:[%s5] sm:$0xf]
    %v778 = vld [vmem:[%s5 + $0x4] sm:$0xf]
    %v779 = vld [vmem:[%s5 + $0x8] sm:$0xf]
    %v780 = vld [vmem:[%s5 + $0xc] sm:$0xf]
    %v781 = vld [vmem:[%s5 + $0x10] sm:$0xf]
    %v782 = vld [vmem:[%s5 + $0x14] sm:$0xf]
    %v783 = vld [vmem:[%s5 + $0x18] sm:$0xf]
    %v784 = vld [vmem:[%s5 + $0x1c] sm:$0xf]
    %v785 = vld [vmem:[%s5 + $0x20] sm:$0xf]
    %v786 = vld [vmem:[%s5 + $0x24] sm:$0xf]
    %v787 = vld [vmem:[%s5 + $0x28] sm:$0xf]
    %v788 = vld [vmem:[%s5 + $0x2c] sm:$0xf]
    %v789 = vld [vmem:[%s5 + $0x30] sm:$0xf]
    %v790 = vld [vmem:[%s5 + $0x34] sm:$0xf]
    %v791 = vld [vmem:[%s5 + $0x38] sm:$0xf]
    %v792 = vld [vmem:[%s5 + $0x3c] sm:$0xf]
    %v793 = vld [vmem:[%s6] sm:$0x1]
    %v795 = vlaneseq
    %v796 = vshrl.u32 %v795, 7
    %v797 = vsub.s32 0, %v796
    %v798 = vrot.slane %v793, %v797
    %v816 = vunpack.c.l.b16 %v777
    %v817 = vunpack.c.l.b16 %v778
    %v818 = vunpack.c.l.b16 %v779
    %v819 = vunpack.c.l.b16 %v780
    %v820 = vunpack.c.l.b16 %v781
    %v821 = vunpack.c.l.b16 %v782
    %v822 = vunpack.c.l.b16 %v783
    %v823 = vunpack.c.l.b16 %v784
    %v824 = vunpack.c.l.b16 %v785
    %v825 = vunpack.c.l.b16 %v786
    %v826 = vunpack.c.l.b16 %v787
    %v827 = vunpack.c.l.b16 %v788
    %v828 = vunpack.c.l.b16 %v789
    %v829 = vunpack.c.l.b16 %v790
    %v830 = vunpack.c.l.b16 %v791
    %v831 = vunpack.c.l.b16 %v792
    %v832 = vpack.c.b16 %v817, %v816
    %v833 = vpack.c.b16 %v819, %v818
    %v834 = vpack.c.b16 %v821, %v820
    %v835 = vpack.c.b16 %v823, %v822
    %v836 = vpack.c.b16 %v825, %v824
    %v837 = vpack.c.b16 %v827, %v826
    %v838 = vpack.c.b16 %v829, %v828
    %v839 = vpack.c.b16 %v831, %v830
    %848 = vmatprep.subr.bf16.mxu0 0
    %849 = vmatpush1.bf16.msra.mxu0 %v839
    %850 = vmatprep.subr.bf16.mxu0 0
    %851 = vmatpush1.bf16.msra.mxu0 %v838
    %852 = vmatprep.subr.bf16.mxu0 0
    %853 = vmatpush1.bf16.msra.mxu0 %v837
    %854 = vmatprep.subr.bf16.mxu0 0
    %855 = vmatpush1.bf16.msra.mxu0 %v836
    %856 = vmatprep.subr.bf16.mxu0 0
    %857 = vmatpush1.bf16.msra.mxu0 %v835
    %858 = vmatprep.subr.bf16.mxu0 0
    %859 = vmatpush1.bf16.msra.mxu0 %v834
    %860 = vmatprep.subr.bf16.mxu0 0
    %861 = vmatpush1.bf16.msra.mxu0 %v833
    %862 = vmatprep.subr.bf16.mxu0 0
    %863 = vmatpush1.bf16.msra.mxu0 %v832
    %864 = vmatprep.subr.bf16.mxu0 0
    %865 = vmatpush2.bf16.msra.mxu0 0
    %866 = vmatprep.subr.bf16.mxu0 0
    %867 = vmatpush2.bf16.msra.mxu0 0
    %868 = vmatprep.subr.bf16.mxu0 0
    %869 = vmatpush2.bf16.msra.mxu0 0
    %870 = vmatprep.subr.bf16.mxu0 0
    %871 = vmatpush2.bf16.msra.mxu0 0
    %872 = vmatprep.subr.bf16.mxu0 0
    %873 = vmatpush2.bf16.msra.mxu0 0
    %874 = vmatprep.subr.bf16.mxu0 0
    %875 = vmatpush2.bf16.msra.mxu0 0
    %876 = vmatprep.subr.bf16.mxu0 0
    %877 = vmatpush2.bf16.msra.mxu0 0
    %878 = vmatprep.subr.bf16.mxu0 0
    %879 = vmatpush2.bf16.msra.mxu0 0
    %880 = vmatprep.mubr.bf16.mxu0 0
    %881 = vmatmul.mubr.bf16.gmra.mxu0 %v776
    %v882 = vpop.f32.mrf.mxu0
    %v883 = vadd.f32 %v798, %v882
    %v884 = vpop.f32.mrf.mxu0
    %v885 = vpop.f32.mrf.mxu0
    %v886 = vpop.f32.mrf.mxu0
    %887 = vdwg.mxu0
    %v888 = vmax.f32 %v883, 0.0
    %v889 = vpack.c.bf16 %v888, %v888
    %v890 = vld [vmem:[%s7] sm:$0xf]
    %v891 = vld [vmem:[%s7 + $0x4] sm:$0xf]
    %v892 = vld [vmem:[%s7 + $0x8] sm:$0xf]
    %v893 = vld [vmem:[%s7 + $0xc] sm:$0xf]
    %v894 = vld [vmem:[%s7 + $0x10] sm:$0xf]
    %v895 = vld [vmem:[%s7 + $0x14] sm:$0xf]
    %v896 = vld [vmem:[%s7 + $0x18] sm:$0xf]
    %v897 = vld [vmem:[%s7 + $0x1c] sm:$0xf]
    %v898 = vld [vmem:[%s7 + $0x20] sm:$0xf]
    %v899 = vld [vmem:[%s7 + $0x24] sm:$0xf]
    %v900 = vld [vmem:[%s7 + $0x28] sm:$0xf]
    %v901 = vld [vmem:[%s7 + $0x2c] sm:$0xf]
    %v902 = vld [vmem:[%s7 + $0x30] sm:$0xf]
    %v903 = vld [vmem:[%s7 + $0x34] sm:$0xf]
    %v904 = vld [vmem:[%s7 + $0x38] sm:$0xf]
    %v905 = vld [vmem:[%s7 + $0x3c] sm:$0xf]
    %v906 = vld [vmem:[%s8] sm:$0x1]
    %v908 = vlaneseq
    %v909 = vshrl.u32 %v908, 7
    %v910 = vsub.s32 0, %v909
    %v911 = vrot.slane %v906, %v910
    %v929 = vunpack.c.l.b16 %v890
    %v930 = vunpack.c.l.b16 %v891
    %v931 = vunpack.c.l.b16 %v892
    %v932 = vunpack.c.l.b16 %v893
    %v933 = vunpack.c.l.b16 %v894
    %v934 = vunpack.c.l.b16 %v895
    %v935 = vunpack.c.l.b16 %v896
    %v936 = vunpack.c.l.b16 %v897
    %v937 = vunpack.c.l.b16 %v898
    %v938 = vunpack.c.l.b16 %v899
    %v939 = vunpack.c.l.b16 %v900
    %v940 = vunpack.c.l.b16 %v901
    %v941 = vunpack.c.l.b16 %v902
    %v942 = vunpack.c.l.b16 %v903
    %v943 = vunpack.c.l.b16 %v904
    %v944 = vunpack.c.l.b16 %v905
    %v945 = vpack.c.b16 %v930, %v929
    %v946 = vpack.c.b16 %v932, %v931
    %v947 = vpack.c.b16 %v934, %v933
    %v948 = vpack.c.b16 %v936, %v935
    %v949 = vpack.c.b16 %v938, %v937
    %v950 = vpack.c.b16 %v940, %v939
    %v951 = vpack.c.b16 %v942, %v941
    %v952 = vpack.c.b16 %v944, %v943
    %961 = vmatprep.subr.bf16.mxu0 0
    %962 = vmatpush1.bf16.msra.mxu0 %v952
    %963 = vmatprep.subr.bf16.mxu0 0
    %964 = vmatpush1.bf16.msra.mxu0 %v951
    %965 = vmatprep.subr.bf16.mxu0 0
    %966 = vmatpush1.bf16.msra.mxu0 %v950
    %967 = vmatprep.subr.bf16.mxu0 0
    %968 = vmatpush1.bf16.msra.mxu0 %v949
    %969 = vmatprep.subr.bf16.mxu0 0
    %970 = vmatpush1.bf16.msra.mxu0 %v948
    %971 = vmatprep.subr.bf16.mxu0 0
    %972 = vmatpush1.bf16.msra.mxu0 %v947
    %973 = vmatprep.subr.bf16.mxu0 0
    %974 = vmatpush1.bf16.msra.mxu0 %v946
    %975 = vmatprep.subr.bf16.mxu0 0
    %976 = vmatpush1.bf16.msra.mxu0 %v945
    %977 = vmatprep.subr.bf16.mxu0 0
    %978 = vmatpush2.bf16.msra.mxu0 0
    %979 = vmatprep.subr.bf16.mxu0 0
    %980 = vmatpush2.bf16.msra.mxu0 0
    %981 = vmatprep.subr.bf16.mxu0 0
    %982 = vmatpush2.bf16.msra.mxu0 0
    %983 = vmatprep.subr.bf16.mxu0 0
    %984 = vmatpush2.bf16.msra.mxu0 0
    %985 = vmatprep.subr.bf16.mxu0 0
    %986 = vmatpush2.bf16.msra.mxu0 0
    %987 = vmatprep.subr.bf16.mxu0 0
    %988 = vmatpush2.bf16.msra.mxu0 0
    %989 = vmatprep.subr.bf16.mxu0 0
    %990 = vmatpush2.bf16.msra.mxu0 0
    %991 = vmatprep.subr.bf16.mxu0 0
    %992 = vmatpush2.bf16.msra.mxu0 0
    %993 = vmatprep.mubr.bf16.mxu0 0
    %994 = vmatmul.mubr.bf16.gmra.mxu0 %v889
    %v995 = vpop.f32.mrf.mxu0
    %v996 = vadd.f32 %v911, %v995
    %v997 = vpop.f32.mrf.mxu0
    %v998 = vpop.f32.mrf.mxu0
    %v999 = vpop.f32.mrf.mxu0
    %1000 = vdwg.mxu0
    %1001 = vst [vmem:[#allocation5] sm:$0x3] %v996
    // Predicated region
    $region42: #{mnist_net_forward.1} parent=1 // pred_check
      _
    $region43: #{mnist_net_forward.1} parent=1 // pred_check_branch
      %1003 = sbr.rel (0) target = $region45
    $region44: #{mnist_net_forward.1} parent=1 // pred_region
      %s1005 = ssub.s32 32, 32
      %1006 = vsyncadd [#allocation4], %s1005
      %s1008 = sshll.u32 [#allocation5], 4
      %s1009 = int_to_ptr.vmem [resolvable:$true] %s1008
      %1011 = dma.vmem_to_hbm [thread:$0]  %s1009, 32, %s9, [#allocation4]
    $region45: #{mnist_net_forward.1} parent=1 // pred_fallthru
      _
    // Predicated region
    $region46: #{mnist_net_forward.1} parent=1 // pred_check
      _
    $region47: #{mnist_net_forward.1} parent=1 // pred_check_branch
      %1013 = sbr.rel (0) target = $region49
    $region48: #{mnist_net_forward.1} parent=1 // pred_region
      %1014 = dma.done [#allocation4], 32
    $region49: #{mnist_net_forward.1} parent=1 // pred_fallthru
      _
    %1015 = vsyncpa [#allocation3], 1
    %1016 = vsyncpa [#allocation4], 1

</llo_original>
